<compile_context>
chip_gen: v7x
topology: tpu7x:2x2x1
jax: 0.10.0
libtpu: 0.0.40
codegen_flags: <defaults>
</compile_context>

<pallas_src>
import math

import jax
import jax.numpy as jnp
from jax.experimental import pallas as pl
from jax.experimental.pallas import tpu as pltpu


def _make_kernel(c_orig, fold, permute, tile, tiles_per_chunk, nf_valid, has_pad):
    """c_orig = original channel count, fold = sublane fold factor k (layout is
    (C*k, N/k)), permute flips the checkerboard, tile = lane width of one block."""
    half = float(c_orig // 2)
    target = 0 if permute else 1

    def kernel(x_ref, pe_ref, po_ref, e_ref, s_ref, rn_ref, off_ref,
               out_ref, logdet_ref):
        n = pl.program_id(2)

        x = x_ref[0]                                     # (Ck, T), native dtype
        ck, t = x.shape

        # Lane parity: the only in-kernel iota, kept at (1, T) and broadcast
        # implicitly against (Ck, 1) / (k, T) operands.
        lane = jax.lax.broadcasted_iota(jnp.int32, (1, t), 1)
        lane_par = lane & 1

        # Channel-mean of the masked 1x1 conv WITHOUT materializing masked x:
        # two tiny parity-split matmuls on the MXU, then a per-lane-parity
        # select on the small (k, T) result.
        d_even = jnp.dot(pe_ref[...], x, preferred_element_type=jnp.float32)   # (k,T)
        d_odd = jnp.dot(po_ref[...], x, preferred_element_type=jnp.float32)    # (k,T)
        pool_g = jnp.where(lane_par == target, d_even, d_odd) + off_ref[0]
        attn_g = jax.nn.sigmoid(pool_g) + 1e-6                                 # (k,T)

        # Replicate the per-group attention to all Ck rows.  For fold == 1 the
        # implicit (1, T) broadcast inside the select below is free; for
        # fold > 1 a tiny one-hot (Ck, k)@(k, T) MXU dot avoids sublane copies.
        if fold == 1:
            attn_full = attn_g
        else:
            attn_full = jnp.dot(e_ref[...], attn_g,
                                preferred_element_type=jnp.float32)            # (Ck,T)

        # Checkerboard gate: hot rows take sigmoid(s)+eps (per channel, implicit
        # (Ck,1) broadcast), cold rows take the spatial attention.  One select.
        hot = rn_ref[...] == lane_par                      # (Ck,1)==(1,T) -> (Ck,T)
        gate = jnp.where(hot, s_ref[...], attn_full)       # (Ck, T) f32
        out_ref[0] = (x * gate.astype(x.dtype)).astype(out_ref.dtype)

        # Per-(batch, chunk) logdet accumulated along the arbitrary tile axis.
        @pl.when(n == 0)
        def _():
            logdet_ref[...] = jnp.zeros_like(logdet_ref)

        if has_pad:
            col0 = (pl.program_id(1) * tiles_per_chunk + n) * tile
            valid = (col0 + lane) < nf_valid               # mask zero-padded cols
            contrib = jnp.sum(jnp.where(valid, jnp.log(attn_g), 0.0))
        else:
            contrib = jnp.sum(jnp.log(attn_g))
        logdet_ref[...] += half * contrib

    return kernel


def _choose_tile(nf, ck):
    """Pick the spatial tile T (lanes) and the padded Nf.

    The (Ck, T) f32 slab is capped at ~1M elements (~4 MiB) so double-buffered
    in/out blocks plus a handful of live full-tile f32 temporaries stay under
    ~40-48 MiB (safe for v7x's 64 MiB physical VMEM) while each step stays big
    enough to amortize the ~0.35 us/step overhead.  Returns (T, Nf_pad, num_tiles)."""
    elem_cap = 1 << 20
    cap = max(128, (elem_cap // max(1, ck)) // 128 * 128)
    if nf <= cap:
        return nf, nf, 1
    # Prefer a 128-aligned divisor of nf (no padding), but don't accept tiles
    # much smaller than the cap.
    floor = max(128, (cap // 2) // 128 * 128)
    t = cap
    while t >= floor:
        if nf % t == 0:
            return t, nf, nf // t
        t -= 128
    # No good divisor: pad nf up to a multiple of the cap-sized tile (pad
    # columns are zero-filled in the wrapper and masked out of the logdet).
    num = -(-nf // cap)
    return cap, num * cap, num


def spatial_first_order_attn(x, weight, bias, s, offset, permute=False):
    """Forward pass (reverse=False). Returns (out_new, logdet)."""
    B, C, H, W = x.shape
    assert H == W, "module's mask construction assumes H == W"
    N = H * W
    f32 = jnp.float32

    # --- sublane fold: fill >= 8 sublanes when C is small (free reshape) ----------
    k = 1
    if C < 8:
        cand = 1
        while C * cand < 8:
            cand *= 2
        if N % cand == 0 and (N // cand) % 2 == 0:
            k = cand
    Ck = C * k
    Nf = N // k

    T, Nf_pad, num_tiles = _choose_tile(Nf, Ck)
    has_pad = Nf_pad != Nf
    # Split spatial tiles into 2 parallel chunks so both v7x TensorCores are
    # busy when B is 1 or odd (near-zero cost on single-TC v5e/v6e).
    n_chunks = 2 if (num_tiles >= 2 and num_tiles % 2 == 0) else 1
    tiles_per_chunk = num_tiles // n_chunks

    x3 = x.reshape(B, Ck, Nf)                        # keeps dtype; no HBM copy
    if has_pad:
        x3 = jnp.pad(x3, ((0, 0), (0, 0), (0, Nf_pad - Nf)))

    # --- tiny parameter preprocessing (wrapper-side XLA ops) -----------------------
    chan = jnp.arange(Ck, dtype=jnp.int32) // k      # original channel of row c'
    grp = jnp.arange(Ck, dtype=jnp.int32) % k        # spatial group of row c'
    row_par = chan & 1

    w2 = weight.reshape(C, C).astype(f32)
    w_mean = jnp.mean(w2, axis=0)                    # mean over out-channels, (C,)
    w_row = w_mean[chan]                             # (Ck,)

    onehot_g = (jnp.arange(k, dtype=jnp.int32)[:, None] == grp[None, :]).astype(f32)
    Pe = (onehot_g * w_row[None, :] * (row_par[None, :] == 0)).astype(x.dtype)  # (k,Ck)
    Po = (onehot_g * w_row[None, :] * (row_par[None, :] == 1)).astype(x.dtype)  # (k,Ck)
    E = (grp[:, None] == jnp.arange(k, dtype=jnp.int32)[None, :]).astype(f32)   # (Ck,k)

    s_sig_c = jax.nn.sigmoid(s.reshape(C).astype(f32)) + 1e-6
    s_fold = s_sig_c[chan].reshape(Ck, 1)

    target = 0 if permute else 1
    row_need = (row_par ^ target).astype(jnp.int32).reshape(Ck, 1)  # hot lane parity

    b_mean = jnp.mean(bias.astype(f32))
    off_total = jnp.reshape(offset, (1,)).astype(f32) + b_mean      # offset + mean(bias)

    # Batch-independent logdet term hoisted out of the kernel (exact mask counts).
    n_odd = N // 2
    n_even = N - n_odd
    c_even = (jnp.arange(C) % 2) == 0
    counts = jnp.where(c_even, n_even, n_odd) if permute else \
        jnp.where(c_even, n_odd, n_even)
    logdet_const = jnp.sum(jnp.log(s_sig_c) * counts.astype(f32))

    kernel = _make_kernel(C, k, permute, T, tiles_per_chunk, Nf, has_pad)

    # VMEM budget: 2x double-buffered in + out blocks, ~6 live full-tile f32
    # temporaries, plus slack.  Clamped to [32, 48] MiB (safe on v7x's 64 MiB).
    slab_io = Ck * T * x.dtype.itemsize
    slab_f32 = Ck * T * 4
    vmem_limit = int(min(max(4 * slab_io + 6 * slab_f32 + (2 << 20), 32 << 20),
                         48 << 20))

    cost = pl.CostEstimate(
        flops=int(B * Ck * Nf_pad * (6 * k + 6)),
        transcendentals=int(2 * B * k * Nf_pad),
        bytes_accessed=int(2 * B * Ck * Nf_pad * x.dtype.itemsize
                           + 4 * (4 * k * Ck + 2 * Ck + 1 + B * n_chunks * 128)),
    )

    out3, logdet4 = pl.pallas_call(
        kernel,
        grid=(B, n_chunks, tiles_per_chunk),
        in_specs=[
            pl.BlockSpec((1, Ck, T),
                         lambda b, p, n: (b, 0, p * tiles_per_chunk + n)),  # x
            pl.BlockSpec((k, Ck), lambda b, p, n: (0, 0)),   # even-parity conv-mean
            pl.BlockSpec((k, Ck), lambda b, p, n: (0, 0)),   # odd-parity conv-mean
            pl.BlockSpec((Ck, k), lambda b, p, n: (0, 0)),   # one-hot group map
            pl.BlockSpec((Ck, 1), lambda b, p, n: (0, 0)),   # sigmoid(s)+eps per row
            pl.BlockSpec((Ck, 1), lambda b, p, n: (0, 0)),   # hot lane parity per row
            pl.BlockSpec(memory_space=pltpu.SMEM),           # offset + mean(bias)
        ],
        out_specs=[
            pl.BlockSpec((1, Ck, T),
                         lambda b, p, n: (b, 0, p * tiles_per_chunk + n)),  # out
            pl.BlockSpec((1, 1, 1, 128), lambda b, p, n: (b, p, 0, 0)),     # logdet
        ],
        out_shape=[
            jax.ShapeDtypeStruct((B, Ck, Nf_pad), x.dtype),
            jax.ShapeDtypeStruct((B, n_chunks, 1, 128), jnp.float32),
        ],
        compiler_params=pltpu.CompilerParams(
            dimension_semantics=("parallel", "parallel", "arbitrary"),
            vmem_limit_bytes=vmem_limit),
        cost_estimate=cost,
    )(x3, Pe, Po, E, s_fold, row_need, off_total)

    if has_pad:
        out3 = out3[:, :, :Nf]
    out = out3.reshape(B, C, H, W)
    logdet = jnp.sum(logdet4[:, :, 0, 0], axis=1) + logdet_const
    return out, logdet


def _reference(x, weight, bias, s, offset, permute=False):
    """Pure-JAX reference of the PyTorch forward (reverse=False)."""
    B, C, H, W = x.shape
    N = H * W
    c_idx = jnp.arange(C)[:, None]
    n_idx = jnp.arange(N)[None, :]
    mask = ((c_idx + n_idx) % 2).astype(jnp.float32)
    if permute:
        mask = 1.0 - mask
    xm = x.reshape(B, C, N) * mask
    w2 = weight.reshape(C, C)
    z = jnp.einsum('oc,bcn->bon', w2, xm) + bias[None, :, None]
    pool = jnp.mean(z, axis=1)                                   # (B, N)
    attn = jax.nn.sigmoid(pool + offset) + 1e-6                  # (B, N)
    s_sig = jax.nn.sigmoid(s.reshape(1, C, 1)) + 1e-6
    attn_mask = (1.0 - mask)[None] * attn[:, None, :] + mask[None] * s_sig
    out = x.reshape(B, C, N) * attn_mask
    logdet = jnp.sum((C // 2) * jnp.log(attn), axis=-1) \
        + jnp.sum(jnp.log(s_sig) * mask)
    return out.reshape(B, C, H, W), logdet


if __name__ == "__main__":
    B, C, H, W = 2, 4, 16, 16

    key = jax.random.PRNGKey(0)
    k_w, k_b, k_s, k_x = jax.random.split(key, 4)

    # Deterministic parameter init mirroring the module's __init__ shapes:
    # weight: kaiming_uniform(a=sqrt(5)) on (C, C, 1) -> U(-1/sqrt(fan_in), 1/sqrt(fan_in))
    fan_in = C * 1
    bound = 1.0 / math.sqrt(fan_in)
    weight = jax.random.uniform(k_w, (C, C, 1), jnp.float32, -bound, bound)
    bias = jax.random.uniform(k_b, (C,), jnp.float32, -bound, bound)
    s = jax.random.normal(k_s, (1, C, 1), jnp.float32)
    offset = jnp.ones((1,), jnp.float32) * 8.0

    x = jax.random.normal(k_x, (B, C, H, W), jnp.float32)

    for permute in (False, True):
        out, logdet = spatial_first_order_attn(x, weight, bias, s, offset,
                                               permute=permute)
        out = jax.block_until_ready(out)
        logdet = jax.block_until_ready(logdet)

        ref_out, ref_logdet = _reference(x, weight, bias, s, offset, permute=permute)
        assert out.shape == (B, C, H, W) and logdet.shape == (B,)
        assert jnp.allclose(out, ref_out, rtol=1e-5, atol=1e-5), permute
        assert jnp.allclose(logdet, ref_logdet, rtol=1e-5, atol=1e-3), permute

    # TODO(synk): reverse=True path (inverse flow) not implemented; only the default
    # forward (reverse=False) semantics are reproduced.
    print("KERNEL_OK")
</pallas_src>

<mosaic_0001>
module attributes {stable_mosaic.version = 11 : i64} {
  func.func @kernel(%arg0: i32, %arg1: i32, %arg2: i32, %arg3: memref<1x8x128xf32, #tpu.memory_space<vmem>>, %arg4: memref<2x8xf32, #tpu.memory_space<vmem>>, %arg5: memref<2x8xf32, #tpu.memory_space<vmem>>, %arg6: memref<8x2xf32, #tpu.memory_space<vmem>>, %arg7: memref<8x1xf32, #tpu.memory_space<vmem>>, %arg8: memref<8x1xi32, #tpu.memory_space<vmem>>, %arg9: memref<1xf32, #tpu.memory_space<smem>>, %arg10: memref<1x8x128xf32, #tpu.memory_space<vmem>>, %arg11: memref<1x1x1x128xf32, #tpu.memory_space<vmem>>) attributes {dimension_semantics = [#tpu.dimension_semantics<parallel>, #tpu.dimension_semantics<parallel>, #tpu.dimension_semantics<arbitrary>], iteration_bounds = array<i64: 2, 1, 1>, scalar_prefetch = 0 : i64, scratch_operands = 0 : i64, tpu.core_type = #tpu.core_type<tc>, window_params = [{transform_indices = @transform_0, window_bounds = array<i64: 1, 8, 128>}, {pipeline_mode = #tpu.pipeline_mode<synchronous>, transform_indices = @transform_1, window_bounds = array<i64: 2, 8>}, {pipeline_mode = #tpu.pipeline_mode<synchronous>, transform_indices = @transform_2, window_bounds = array<i64: 2, 8>}, {pipeline_mode = #tpu.pipeline_mode<synchronous>, transform_indices = @transform_3, window_bounds = array<i64: 8, 2>}, {pipeline_mode = #tpu.pipeline_mode<synchronous>, transform_indices = @transform_4, window_bounds = array<i64: 8, 1>}, {pipeline_mode = #tpu.pipeline_mode<synchronous>, transform_indices = @transform_5, window_bounds = array<i64: 8, 1>}, {transform_indices = @transform_6, window_bounds = array<i64: 1>}, {transform_indices = @transform_7, window_bounds = array<i64: 1, 8, 128>}, {transform_indices = @transform_8, window_bounds = array<i64: 1, 1, 1, 128>}]} {
    %c0 = arith.constant 0 : index
    %c0_0 = arith.constant 0 : index
    %c0_1 = arith.constant 0 : index
    %0 = vector.load %arg3[%c0, %c0_0, %c0_1] : memref<1x8x128xf32, #tpu.memory_space<vmem>>, vector<1x8x128xf32>
    %1 = vector.shape_cast %0 : vector<1x8x128xf32> to vector<8x128xf32>
    %2 = tpu.iota {dimensions = array<i32: 1>} : vector<1x128xi32>
    %c1_i32 = arith.constant 1 : i32
    %3 = vector.broadcast %c1_i32 : i32 to vector<1x128xi32>
    %4 = arith.andi %2, %3 : vector<1x128xi32>
    %c0_2 = arith.constant 0 : index
    %c0_3 = arith.constant 0 : index
    %5 = vector.load %arg4[%c0_2, %c0_3] : memref<2x8xf32, #tpu.memory_space<vmem>>, vector<2x8xf32>
    %cst = arith.constant dense<0.000000e+00> : vector<2x128xf32>
    %6 = tpu.matmul %5, %1, %cst {dimension_numbers = #tpu.dot_dimension_numbers<[1], [0], [0], [1], [0, 0, 1, 1], [], []>} : vector<2x8xf32>, vector<8x128xf32>, vector<2x128xf32> -> vector<2x128xf32>
    %c0_4 = arith.constant 0 : index
    %c0_5 = arith.constant 0 : index
    %7 = vector.load %arg5[%c0_4, %c0_5] : memref<2x8xf32, #tpu.memory_space<vmem>>, vector<2x8xf32>
    %cst_6 = arith.constant dense<0.000000e+00> : vector<2x128xf32>
    %8 = tpu.matmul %7, %1, %cst_6 {dimension_numbers = #tpu.dot_dimension_numbers<[1], [0], [0], [1], [0, 0, 1, 1], [], []>} : vector<2x8xf32>, vector<8x128xf32>, vector<2x128xf32> -> vector<2x128xf32>
    %c1_i32_7 = arith.constant 1 : i32
    %9 = vector.broadcast %c1_i32_7 : i32 to vector<1x128xi32>
    %10 = arith.cmpi eq, %4, %9 : vector<1x128xi32>
    %11 = vector.shape_cast %10 : vector<1x128xi1> to vector<1x128xi1>
    %12 = vector.broadcast %11 : vector<1x128xi1> to vector<2x128xi1>
    %13 = arith.select %12, %6, %8 : vector<2x128xi1>, vector<2x128xf32>
    %c0_8 = arith.constant 0 : index
    %14 = memref.load %arg9[%c0_8] : memref<1xf32, #tpu.memory_space<smem>>
    %15 = vector.broadcast %14 : f32 to vector<2x128xf32>
    %16 = arith.addf %13, %15 : vector<2x128xf32>
    %17 = arith.negf %16 : vector<2x128xf32>
    %18 = math.exp %17 : vector<2x128xf32>
    %cst_9 = arith.constant 1.000000e+00 : f32
    %19 = vector.broadcast %cst_9 : f32 to vector<2x128xf32>
    %20 = arith.addf %19, %18 : vector<2x128xf32>
    %21 = arith.divf %19, %20 : vector<2x128xf32>
    %cst_10 = arith.constant 9.99999997E-7 : f32
    %22 = vector.broadcast %cst_10 : f32 to vector<2x128xf32>
    %23 = arith.addf %21, %22 : vector<2x128xf32>
    %c0_11 = arith.constant 0 : index
    %c0_12 = arith.constant 0 : index
    %24 = vector.load %arg6[%c0_11, %c0_12] : memref<8x2xf32, #tpu.memory_space<vmem>>, vector<8x2xf32>
    %cst_13 = arith.constant dense<0.000000e+00> : vector<8x128xf32>
    %25 = tpu.matmul %24, %23, %cst_13 {dimension_numbers = #tpu.dot_dimension_numbers<[1], [0], [0], [1], [0, 0, 1, 1], [], []>} : vector<8x2xf32>, vector<2x128xf32>, vector<8x128xf32> -> vector<8x128xf32>
    %c0_14 = arith.constant 0 : index
    %c0_15 = arith.constant 0 : index
    %26 = vector.load %arg8[%c0_14, %c0_15] : memref<8x1xi32, #tpu.memory_space<vmem>>, vector<8x1xi32>
    %27 = vector.broadcast %26 : vector<8x1xi32> to vector<8x128xi32>
    %28 = vector.broadcast %4 : vector<1x128xi32> to vector<8x128xi32>
    %29 = arith.cmpi eq, %27, %28 : vector<8x128xi32>
    %c0_16 = arith.constant 0 : index
    %c0_17 = arith.constant 0 : index
    %30 = vector.load %arg7[%c0_16, %c0_17] : memref<8x1xf32, #tpu.memory_space<vmem>>, vector<8x1xf32>
    %31 = vector.shape_cast %30 : vector<8x1xf32> to vector<8x1xf32>
    %32 = vector.broadcast %31 : vector<8x1xf32> to vector<8x128xf32>
    %33 = arith.select %29, %32, %25 : vector<8x128xi1>, vector<8x128xf32>
    %34 = arith.mulf %1, %33 : vector<8x128xf32>
    %c0_18 = arith.constant 0 : index
    %c0_19 = arith.constant 0 : index
    %c0_20 = arith.constant 0 : index
    %35 = vector.load %arg10[%c0_18, %c0_19, %c0_20] : memref<1x8x128xf32, #tpu.memory_space<vmem>>, vector<1x8x128xf32>
    %36 = vector.shape_cast %35 : vector<1x8x128xf32> to vector<8x128xf32>
    %37 = vector.shape_cast %34 : vector<8x128xf32> to vector<1x8x128xf32>
    tpu.vector_store %arg10[%c0_18, %c0_19, %c0_20], %37 {strides = array<i32>} : memref<1x8x128xf32, #tpu.memory_space<vmem>>, vector<1x8x128xf32>,
    %c0_i32 = arith.constant 0 : i32
    %38 = arith.cmpi eq, %arg2, %c0_i32 : i32
    %39 = arith.extui %38 : i1 to i32
    %c0_i32_21 = arith.constant 0 : i32
    %40 = arith.cmpi ne, %39, %c0_i32_21 : i32
    scf.if %40 {
      %cst_32 = arith.constant 0.000000e+00 : f32
      %51 = vector.broadcast %cst_32 : f32 to vector<1x1x1x128xf32>
      %c0_33 = arith.constant 0 : index
      %c0_34 = arith.constant 0 : index
      %c0_35 = arith.constant 0 : index
      %c0_36 = arith.constant 0 : index
      %52 = vector.load %arg11[%c0_33, %c0_34, %c0_35, %c0_36] : memref<1x1x1x128xf32, #tpu.memory_space<vmem>>, vector<1x1x1x128xf32>
      tpu.vector_store %arg11[%c0_33, %c0_34, %c0_35, %c0_36], %51 {strides = array<i32>} : memref<1x1x1x128xf32, #tpu.memory_space<vmem>>, vector<1x1x1x128xf32>,
    } else {
    }
    %41 = math.log %23 : vector<2x128xf32>
    %42 = vector.shape_cast %41 : vector<2x128xf32> to vector<1x2x128xf32>
    %cst_22 = arith.constant dense<0.000000e+00> : vector<1xf32>
    %43 = vector.multi_reduction <add>, %42, %cst_22 [1, 2] : vector<1x2x128xf32> to vector<1xf32>
    %44 = vector.shape_cast %43 : vector<1xf32> to vector<1x1x1xf32>
    %45 = vector.extract %44[0, 0, 0] : f32 from vector<1x1x1xf32>
    %c0_23 = arith.constant 0 : index
    %c0_24 = arith.constant 0 : index
    %c0_25 = arith.constant 0 : index
    %c0_26 = arith.constant 0 : index
    %46 = vector.load %arg11[%c0_23, %c0_24, %c0_25, %c0_26] : memref<1x1x1x128xf32, #tpu.memory_space<vmem>>, vector<1x1x1x128xf32>
    %cst_27 = arith.constant 2.000000e+00 : f32
    %47 = arith.mulf %cst_27, %45 : f32
    %48 = vector.broadcast %47 : f32 to vector<1x1x1x128xf32>
    %49 = arith.addf %46, %48 : vector<1x1x1x128xf32>
    %c0_28 = arith.constant 0 : index
    %c0_29 = arith.constant 0 : index
    %c0_30 = arith.constant 0 : index
    %c0_31 = arith.constant 0 : index
    %50 = vector.load %arg11[%c0_28, %c0_29, %c0_30, %c0_31] : memref<1x1x1x128xf32, #tpu.memory_space<vmem>>, vector<1x1x1x128xf32>
    tpu.vector_store %arg11[%c0_28, %c0_29, %c0_30, %c0_31], %49 {strides = array<i32>} : memref<1x1x1x128xf32, #tpu.memory_space<vmem>>, vector<1x1x1x128xf32>,
    return
  }
  func.func @transform_0(%arg0: i32, %arg1: i32, %arg2: i32) -> (i32, i32, i32) {
    %c1_i32 = arith.constant 1 : i32
    %0 = arith.muli %arg1, %c1_i32 : i32
    %1 = arith.addi %0, %arg2 : i32
    %c0_i32 = arith.constant 0 : i32
    %c0_i32_0 = arith.constant 0 : i32
    return %arg0, %c0_i32, %1 : i32, i32, i32
  }
  func.func @transform_1(%arg0: i32, %arg1: i32, %arg2: i32) -> (i32, i32) {
    %c0_i32 = arith.constant 0 : i32
    %c0_i32_0 = arith.constant 0 : i32
    %c0_i32_1 = arith.constant 0 : i32
    return %c0_i32, %c0_i32_0 : i32, i32
  }
  func.func @transform_2(%arg0: i32, %arg1: i32, %arg2: i32) -> (i32, i32) {
    %c0_i32 = arith.constant 0 : i32
    %c0_i32_0 = arith.constant 0 : i32
    %c0_i32_1 = arith.constant 0 : i32
    return %c0_i32, %c0_i32_0 : i32, i32
  }
  func.func @transform_3(%arg0: i32, %arg1: i32, %arg2: i32) -> (i32, i32) {
    %c0_i32 = arith.constant 0 : i32
    %c0_i32_0 = arith.constant 0 : i32
    %c0_i32_1 = arith.constant 0 : i32
    return %c0_i32, %c0_i32_0 : i32, i32
  }
  func.func @transform_4(%arg0: i32, %arg1: i32, %arg2: i32) -> (i32, i32) {
    %c0_i32 = arith.constant 0 : i32
    %c0_i32_0 = arith.constant 0 : i32
    %c0_i32_1 = arith.constant 0 : i32
    return %c0_i32, %c0_i32_0 : i32, i32
  }
  func.func @transform_5(%arg0: i32, %arg1: i32, %arg2: i32) -> (i32, i32) {
    %c0_i32 = arith.constant 0 : i32
    %c0_i32_0 = arith.constant 0 : i32
    %c0_i32_1 = arith.constant 0 : i32
    return %c0_i32, %c0_i32_0 : i32, i32
  }
  func.func @transform_6(%arg0: i32, %arg1: i32, %arg2: i32) -> i32 {
    %c0_i32 = arith.constant 0 : i32
    %c0_i32_0 = arith.constant 0 : i32
    return %c0_i32 : i32
  }
  func.func @transform_7(%arg0: i32, %arg1: i32, %arg2: i32) -> (i32, i32, i32) {
    %c1_i32 = arith.constant 1 : i32
    %0 = arith.muli %arg1, %c1_i32 : i32
    %1 = arith.addi %0, %arg2 : i32
    %c0_i32 = arith.constant 0 : i32
    %c0_i32_0 = arith.constant 0 : i32
    return %arg0, %c0_i32, %1 : i32, i32, i32
  }
  func.func @transform_8(%arg0: i32, %arg1: i32, %arg2: i32) -> (i32, i32, i32, i32) {
    %c0_i32 = arith.constant 0 : i32
    %c0_i32_0 = arith.constant 0 : i32
    %c0_i32_1 = arith.constant 0 : i32
    return %arg0, %arg1, %c0_i32, %c0_i32_0 : i32, i32, i32, i32
  }
}

</mosaic_0001>

<llo_original>
// kernel: tpu_custom_call.1
$region0: #{tpu_custom_call.1}
  #allocation0 [shape = 'u32[]', space=smem, size = 0x4, offset = 0x4, fixed_abs, tag = 'smem constant byte address 0x4 - core index']
  #allocation1 [shape = 'u32[144,128]{1,0:T(1,128)}', space=vmem, size = 0x12000, scoped, tag = 'internal scratch']
  #allocation2 [shape = 'f32[1]{0:T(128)S(6)}', space=smem, size = 0x200, scoped, tag = 'scoped memory for tpu_custom_call.1']
  %s0 = inlined_call_operand.vmem [shape: f32[2,8,128], index: 0, kind: input, shape index: {}]
  %s1 = inlined_call_operand.vmem [shape: f32[2,8], index: 1, kind: input, shape index: {}]
  %s2 = inlined_call_operand.vmem [shape: f32[2,8], index: 2, kind: input, shape index: {}]
  %s3 = inlined_call_operand.vmem [shape: f32[8,2], index: 3, kind: input, shape index: {}]
  %s4 = inlined_call_operand.vmem [shape: f32[8,1], index: 4, kind: input, shape index: {}]
  %s5 = inlined_call_operand.vmem [shape: s32[8,1], index: 5, kind: input, shape index: {}]
  %s6 = inlined_call_operand.<no memory space> [shape: f32[1], index: 6, kind: input, shape index: {}]
  %s7 = inlined_call_operand.hbm [shape: f32[2,8,128], index: 7, kind: output, shape index: {0}]
  %s8 = inlined_call_operand.hbm [shape: f32[2,1,1,128], index: 8, kind: output, shape index: {1}]
  %9 = xla_tuple %s7, %s8
  %s10 = sld [smem:[#allocation0]]
  $region73: #{tpu_custom_call.1} parent=0
    _
  %s12 = ssub.s32 1, %s10
  %s13 = scalar_select 0, %s12, %s10
  %14 = sst [smem:[#allocation2]] %s6
  $region1: #{tpu_custom_call.1} parent=0
    #allocation3 [shape = 'u8[8192]{0}', space=vmem, size = 0x2000, scoped, tag = 'output window, operand 0']
    #allocation4 [shape = 's32[2]{0}', space=sflag, size = 0x8, scoped, tag = 'scoped memory for tpu_custom_call.1']
    #allocation5 [shape = 'u8[1024]{0}', space=vmem, size = 0x400, scoped, tag = 'output window, operand 1']
    #allocation6 [shape = 's32[2]{0}', space=sflag, size = 0x8, scoped, tag = 'scoped memory for tpu_custom_call.1']
    %15 = vsyncpa [#allocation4], 0
    %s16 = scalar_lea.sflag [#allocation4], 1
    %17 = vsyncpa %s16, 0
    %18 = vsyncpa [#allocation6], 0
    %s19 = scalar_lea.sflag [#allocation6], 1
    %20 = vsyncpa %s19, 0
    loop: start=0, step=1, limit=4
    $region2: #{tpu_custom_call.1} parent=1 // loop_pre_header
      _
    $region3: #{tpu_custom_call.1} parent=1 // loop_header
      %s22 = sphi 0, %s26
      %p23 = scmp.ge.s32.totalorder %s22, 4
      %s29 = sphi 0, %s48
      %s30 = sphi 0, %s44
      %s31 = sphi 0, %s40
      %s32 = sphi 0, %s29
      %s33 = sphi 0, %s30
      %s34 = sphi 0, %s31
      %s35 = sphi 0, %s32
      %s36 = sphi 0, %s33
      %s37 = sphi 0, %s34
      %s55 = sphi 0, %s57
      %s58 = sphi 0, %s55
      %s59 = sphi 0, %s58
      %s75 = sphi 0, %s59
      %s79 = sphi 0, %s79
      %s81 = sphi 0, %s79
      %s82 = sphi 0, %s81
      %s96 = sphi 0, %s82
      %s100 = sphi 0, %s100
      %s102 = sphi 0, %s100
      %s103 = sphi 0, %s102
      %s117 = sphi 0, %s103
      %s121 = sphi 0, %s121
      %s123 = sphi 0, %s121
      %s124 = sphi 0, %s123
      %s138 = sphi 0, %s124
      %s142 = sphi 0, %s142
      %s144 = sphi 0, %s142
      %s145 = sphi 0, %s144
      %s159 = sphi 0, %s145
      %s163 = sphi 0, %s163
      %s165 = sphi 0, %s163
      %s166 = sphi 0, %s165
      %s180 = sphi 0, %s166
      %s184 = sphi 0, %s184
      %s186 = sphi 0, %s184
      %s187 = sphi 0, %s186
      %s201 = sphi 0, %s187
      %s211 = sphi 0, %s213
      %s214 = sphi 0, %s211
      %s215 = sphi 0, %s214
      %s231 = sphi 0, %s215
      %s239 = sphi 0, %s241
      %s242 = sphi 0, %s239
      %s243 = sphi 0, %s242
      %s259 = sphi 0, %s243
    $region4: #{tpu_custom_call.1} parent=1 // loop_header_branch
      %25 = sbr.rel (%p23) target = $region8
    $region5: #{tpu_custom_call.1} parent=1 // loop_body
      %s27 = ssub.s32 %s22, 1
      %s28 = ssub.s32 %s22, 2
      %s38 = sadd.s32 1, %s31
      %p39 = scmp.ge.s32.totalorder %s38, 1
      %s40 = scalar_select %p39, 0, %s38
      %s41 = sadd.s32 1, %s30
      %s42 = scalar_select %p39, %s41, %s30
      %p43 = scmp.ge.s32.totalorder %s42, 1
      %s44 = scalar_select %p43, 0, %s42
      %s45 = sadd.s32 1, %s29
      %s46 = scalar_select %p43, %s45, %s29
      %p47 = scmp.ge.s32.totalorder %s46, 2
      %s48 = scalar_select %p47, 0, %s46
      %s49 = sadd.s32 %s30, %s31
      %s50 = sadd.s32 %s44, %s40
      %s51 = ssub.s32 %s29, %s48
      %s52 = ssub.s32 %s49, %s50
      %s53 = sor.u32 %s51, %s52
      %p54 = scmp.eq.s32.totalorder %s53, 0
      %s56 = sadd.s32 %s55, 1
      %s57 = scalar_select %p54, %s55, %s56
      %p60 = pneg %p54
      %p61 = scmp.eq.s32.totalorder %s22, 1
      %p62 = por %p60, %p61
      %p63 = scmp.ne.s32.totalorder %s55, %s58
      %p64 = scmp.eq.s32.totalorder %s22, 0
      %p65 = por %p63, %p64
      %p66 = scmp.ne.s32.totalorder %s55, %s58
      %p67 = scmp.eq.s32.totalorder %s27, 1
      %p68 = por %p66, %p67
      %p69 = scmp.ne.s32.totalorder %s58, %s59
      %p70 = scmp.eq.s32.totalorder %s27, 0
      %p71 = por %p69, %p70
      %p72 = scmp.ne.s32.totalorder %s58, %s59
      %p73 = scmp.eq.s32.totalorder %s28, 1
      %p74 = por %p72, %p73
      %p76 = scmp.ne.s32.totalorder %s59, %s75
      %p77 = scmp.eq.s32.totalorder %s28, 0
      %p78 = por %p76, %p77
      %s80 = sadd.s32 %s79, 1
      %p83 = scmp.eq.s32.totalorder %s22, 1
      %p84 = scmp.ne.s32.totalorder %s79, %s81
      %p85 = scmp.eq.s32.totalorder %s22, 0
      %p86 = por %p84, %p85
      %p87 = scmp.ne.s32.totalorder %s79, %s81
      %p88 = scmp.eq.s32.totalorder %s27, 1
      %p89 = por %p87, %p88
      %p90 = scmp.ne.s32.totalorder %s81, %s82
      %p91 = scmp.eq.s32.totalorder %s27, 0
      %p92 = por %p90, %p91
      %p93 = scmp.ne.s32.totalorder %s81, %s82
      %p94 = scmp.eq.s32.totalorder %s28, 1
      %p95 = por %p93, %p94
      %p97 = scmp.ne.s32.totalorder %s82, %s96
      %p98 = scmp.eq.s32.totalorder %s28, 0
      %p99 = por %p97, %p98
      %s101 = sadd.s32 %s100, 1
      %p104 = scmp.eq.s32.totalorder %s22, 1
      %p105 = scmp.ne.s32.totalorder %s100, %s102
      %p106 = scmp.eq.s32.totalorder %s22, 0
      %p107 = por %p105, %p106
      %p108 = scmp.ne.s32.totalorder %s100, %s102
      %p109 = scmp.eq.s32.totalorder %s27, 1
      %p110 = por %p108, %p109
      %p111 = scmp.ne.s32.totalorder %s102, %s103
      %p112 = scmp.eq.s32.totalorder %s27, 0
      %p113 = por %p111, %p112
      %p114 = scmp.ne.s32.totalorder %s102, %s103
      %p115 = scmp.eq.s32.totalorder %s28, 1
      %p116 = por %p114, %p115
      %p118 = scmp.ne.s32.totalorder %s103, %s117
      %p119 = scmp.eq.s32.totalorder %s28, 0
      %p120 = por %p118, %p119
      %s122 = sadd.s32 %s121, 1
      %p125 = scmp.eq.s32.totalorder %s22, 1
      %p126 = scmp.ne.s32.totalorder %s121, %s123
      %p127 = scmp.eq.s32.totalorder %s22, 0
      %p128 = por %p126, %p127
      %p129 = scmp.ne.s32.totalorder %s121, %s123
      %p130 = scmp.eq.s32.totalorder %s27, 1
      %p131 = por %p129, %p130
      %p132 = scmp.ne.s32.totalorder %s123, %s124
      %p133 = scmp.eq.s32.totalorder %s27, 0
      %p134 = por %p132, %p133
      %p135 = scmp.ne.s32.totalorder %s123, %s124
      %p136 = scmp.eq.s32.totalorder %s28, 1
      %p137 = por %p135, %p136
      %p139 = scmp.ne.s32.totalorder %s124, %s138
      %p140 = scmp.eq.s32.totalorder %s28, 0
      %p141 = por %p139, %p140
      %s143 = sadd.s32 %s142, 1
      %p146 = scmp.eq.s32.totalorder %s22, 1
      %p147 = scmp.ne.s32.totalorder %s142, %s144
      %p148 = scmp.eq.s32.totalorder %s22, 0
      %p149 = por %p147, %p148
      %p150 = scmp.ne.s32.totalorder %s142, %s144
      %p151 = scmp.eq.s32.totalorder %s27, 1
      %p152 = por %p150, %p151
      %p153 = scmp.ne.s32.totalorder %s144, %s145
      %p154 = scmp.eq.s32.totalorder %s27, 0
      %p155 = por %p153, %p154
      %p156 = scmp.ne.s32.totalorder %s144, %s145
      %p157 = scmp.eq.s32.totalorder %s28, 1
      %p158 = por %p156, %p157
      %p160 = scmp.ne.s32.totalorder %s145, %s159
      %p161 = scmp.eq.s32.totalorder %s28, 0
      %p162 = por %p160, %p161
      %s164 = sadd.s32 %s163, 1
      %p167 = scmp.eq.s32.totalorder %s22, 1
      %p168 = scmp.ne.s32.totalorder %s163, %s165
      %p169 = scmp.eq.s32.totalorder %s22, 0
      %p170 = por %p168, %p169
      %p171 = scmp.ne.s32.totalorder %s163, %s165
      %p172 = scmp.eq.s32.totalorder %s27, 1
      %p173 = por %p171, %p172
      %p174 = scmp.ne.s32.totalorder %s165, %s166
      %p175 = scmp.eq.s32.totalorder %s27, 0
      %p176 = por %p174, %p175
      %p177 = scmp.ne.s32.totalorder %s165, %s166
      %p178 = scmp.eq.s32.totalorder %s28, 1
      %p179 = por %p177, %p178
      %p181 = scmp.ne.s32.totalorder %s166, %s180
      %p182 = scmp.eq.s32.totalorder %s28, 0
      %p183 = por %p181, %p182
      %s185 = sadd.s32 %s184, 1
      %p188 = scmp.eq.s32.totalorder %s22, 1
      %p189 = scmp.ne.s32.totalorder %s184, %s186
      %p190 = scmp.eq.s32.totalorder %s22, 0
      %p191 = por %p189, %p190
      %p192 = scmp.ne.s32.totalorder %s184, %s186
      %p193 = scmp.eq.s32.totalorder %s27, 1
      %p194 = por %p192, %p193
      %p195 = scmp.ne.s32.totalorder %s186, %s187
      %p196 = scmp.eq.s32.totalorder %s27, 0
      %p197 = por %p195, %p196
      %p198 = scmp.ne.s32.totalorder %s186, %s187
      %p199 = scmp.eq.s32.totalorder %s28, 1
      %p200 = por %p198, %p199
      %p202 = scmp.ne.s32.totalorder %s187, %s201
      %p203 = scmp.eq.s32.totalorder %s28, 0
      %p204 = por %p202, %p203
      %s205 = sadd.s32 %s30, %s31
      %s206 = sadd.s32 %s44, %s40
      %s207 = ssub.s32 %s29, %s48
      %s208 = ssub.s32 %s205, %s206
      %s209 = sor.u32 %s207, %s208
      %p210 = scmp.eq.s32.totalorder %s209, 0
      %s212 = sadd.s32 %s211, 1
      %s213 = scalar_select %p210, %s211, %s212
      %p216 = pneg %p210
      %p217 = scmp.eq.s32.totalorder %s22, 1
      %p218 = por %p216, %p217
      %p219 = scmp.ne.s32.totalorder %s211, %s214
      %p220 = scmp.eq.s32.totalorder %s22, 0
      %p221 = por %p219, %p220
      %p222 = scmp.ne.s32.totalorder %s211, %s214
      %p223 = scmp.eq.s32.totalorder %s27, 1
      %p224 = por %p222, %p223
      %p225 = scmp.ne.s32.totalorder %s214, %s215
      %p226 = scmp.eq.s32.totalorder %s27, 0
      %p227 = por %p225, %p226
      %p228 = scmp.ne.s32.totalorder %s214, %s215
      %p229 = scmp.eq.s32.totalorder %s28, 1
      %p230 = por %p228, %p229
      %p232 = scmp.ne.s32.totalorder %s215, %s231
      %p233 = scmp.eq.s32.totalorder %s28, 0
      %p234 = por %p232, %p233
      %s235 = ssub.s32 %s29, %s48
      %s236 = ssub.s32 %s30, %s44
      %s237 = sor.u32 %s235, %s236
      %p238 = scmp.eq.s32.totalorder %s237, 0
      %s240 = sadd.s32 %s239, 1
      %s241 = scalar_select %p238, %s239, %s240
      %p244 = pneg %p238
      %p245 = scmp.eq.s32.totalorder %s22, 1
      %p246 = por %p244, %p245
      %p247 = scmp.ne.s32.totalorder %s239, %s242
      %p248 = scmp.eq.s32.totalorder %s22, 0
      %p249 = por %p247, %p248
      %p250 = scmp.ne.s32.totalorder %s239, %s242
      %p251 = scmp.eq.s32.totalorder %s27, 1
      %p252 = por %p250, %p251
      %p253 = scmp.ne.s32.totalorder %s242, %s243
      %p254 = scmp.eq.s32.totalorder %s27, 0
      %p255 = por %p253, %p254
      %p256 = scmp.ne.s32.totalorder %s242, %s243
      %p257 = scmp.eq.s32.totalorder %s28, 1
      %p258 = por %p256, %p257
      %p260 = scmp.ne.s32.totalorder %s243, %s259
      %p261 = scmp.eq.s32.totalorder %s28, 0
      %p262 = por %p260, %p261
      %p263 = scmp.le.s32.totalorder 1, %s22
      %p264 = scmp.lt.s32.totalorder %s22, 3
      %p265 = pnand %p263, %p264
      %p266 = pneg %p265
      // Predicated region
      $region9: #{tpu_custom_call.1} parent=5 // pred_check
        _
      $region10: #{tpu_custom_call.1} parent=5 // pred_check_branch
        %268 = sbr.rel (%p265) target = $region12
      $region11: #{tpu_custom_call.1} parent=5 // pred_region
        %s269 = ssub.s32 %s22, 1
        // Predicated region
        $region13: #{tpu_custom_call.1} parent=11 // pred_check
          %p270 = pneg %p92
        $region14: #{tpu_custom_call.1} parent=11 // pred_check_branch
          %272 = sbr.rel (%p270) target = $region16
        $region15: #{tpu_custom_call.1} parent=11 // pred_region
          _
        $region16: #{tpu_custom_call.1} parent=11 // pred_fallthru
          _
        // Predicated region
        $region17: #{tpu_custom_call.1} parent=11 // pred_check
          %p273 = pneg %p113
        $region18: #{tpu_custom_call.1} parent=11 // pred_check_branch
          %275 = sbr.rel (%p273) target = $region20
        $region19: #{tpu_custom_call.1} parent=11 // pred_region
          _
        $region20: #{tpu_custom_call.1} parent=11 // pred_fallthru
          _
        // Predicated region
        $region21: #{tpu_custom_call.1} parent=11 // pred_check
          %p276 = pneg %p134
        $region22: #{tpu_custom_call.1} parent=11 // pred_check_branch
          %278 = sbr.rel (%p276) target = $region24
        $region23: #{tpu_custom_call.1} parent=11 // pred_region
          _
        $region24: #{tpu_custom_call.1} parent=11 // pred_fallthru
          _
        // Predicated region
        $region25: #{tpu_custom_call.1} parent=11 // pred_check
          %p279 = pneg %p155
        $region26: #{tpu_custom_call.1} parent=11 // pred_check_branch
          %281 = sbr.rel (%p279) target = $region28
        $region27: #{tpu_custom_call.1} parent=11 // pred_region
          _
        $region28: #{tpu_custom_call.1} parent=11 // pred_fallthru
          _
        // Predicated region
        $region29: #{tpu_custom_call.1} parent=11 // pred_check
          %p282 = pneg %p176
        $region30: #{tpu_custom_call.1} parent=11 // pred_check_branch
          %284 = sbr.rel (%p282) target = $region32
        $region31: #{tpu_custom_call.1} parent=11 // pred_region
          _
        $region32: #{tpu_custom_call.1} parent=11 // pred_fallthru
          _
        // Predicated region
        $region33: #{tpu_custom_call.1} parent=11 // pred_check
          %p285 = pneg %p197
        $region34: #{tpu_custom_call.1} parent=11 // pred_check_branch
          %287 = sbr.rel (%p285) target = $region36
        $region35: #{tpu_custom_call.1} parent=11 // pred_region
          _
        $region36: #{tpu_custom_call.1} parent=11 // pred_fallthru
          _
      $region12: #{tpu_custom_call.1} parent=5 // pred_fallthru
        _
      %p288 = scmp.lt.s32.totalorder %s22, 2
      // Predicated region
      $region37: #{tpu_custom_call.1} parent=5 // pred_check
        %p289 = pneg %p288
      $region38: #{tpu_custom_call.1} parent=5 // pred_check_branch
        %291 = sbr.rel (%p289) target = $region40
      $region39: #{tpu_custom_call.1} parent=5 // pred_region
        // Predicated region
        $region41: #{tpu_custom_call.1} parent=39 // pred_check
          %p292 = pneg %p65
        $region42: #{tpu_custom_call.1} parent=39 // pred_check_branch
          %294 = sbr.rel (%p292) target = $region44
        $region43: #{tpu_custom_call.1} parent=39 // pred_region
          %s295 = sadd.s32 %s30, %s31
          %p296 = scmp.lt.s32.totalorder %s29, 1
          %s297 = scalar_select %p296, %s29, 1
          %p298 = scmp.lt.s32.totalorder %s295, 0
          %s299 = scalar_select %p298, %s295, 0
          %s300 = sadd.s32 %s299, %s297
          %s301 = smul.addr %s300, 8
          %s302 = scalar_lea.vmem %s0, %s301
          %s303 = sadd.s32 %s30, %s31
        $region44: #{tpu_custom_call.1} parent=39 // pred_fallthru
          _
      $region40: #{tpu_custom_call.1} parent=5 // pred_fallthru
        _
      %p304 = scmp.le.s32.totalorder 1, %s22
      %p305 = scmp.lt.s32.totalorder %s22, 3
      %p306 = pnand %p304, %p305
      %p307 = pneg %p306
      // Predicated region
      $region45: #{tpu_custom_call.1} parent=5 // pred_check
        _
      $region46: #{tpu_custom_call.1} parent=5 // pred_check_branch
        %309 = sbr.rel (%p306) target = $region48
      $region47: #{tpu_custom_call.1} parent=5 // pred_region
        %s310 = ssub.s32 %s22, 1
        %s311 = sadd.s32 %s33, %s34
        %p312 = scmp.lt.s32.totalorder %s32, 1
        %s313 = scalar_select %p312, %s32, 1
        %p314 = scmp.lt.s32.totalorder %s311, 0
        %s315 = scalar_select %p314, %s311, 0
        %s316 = sadd.s32 %s315, %s313
        %s317 = smul.addr %s316, 8
        %s318 = scalar_lea.vmem %s0, %s317
        %p319 = pneg %p71
        %p320 = pneg %p68
        %p321 = pneg %p92
        %p322 = pneg %p89
        %p323 = pneg %p113
        %p324 = pneg %p110
        %p325 = pneg %p134
        %p326 = pneg %p131
        %p327 = pneg %p155
        %p328 = pneg %p152
        %p329 = pneg %p176
        %p330 = pneg %p173
        %p331 = pneg %p197
        %p332 = pneg %p194
        %p333 = pneg %p227
        %p334 = pneg %p224
        %s335 = sand.u32 %s214, 1
        %s336 = scalar_lea.sflag [#allocation4], %s335
        %s337 = sand.u32 %s214, 1
        %s338 = smul.addr %s337, 8
        %s339 = scalar_lea.vmem [#allocation3], %s338
        %p340 = pneg %p255
        %p341 = pneg %p252
        %s342 = sand.u32 %s242, 1
        %s343 = scalar_lea.sflag [#allocation6], %s342
        %s344 = sand.u32 %s242, 1
        %s345 = scalar_lea.vmem [#allocation5], %s344
        %s346 = sadd.s32 %s33, %s34
        %p347 = scmp.lt.s32.totalorder %s32, 1
        %s348 = scalar_select %p347, %s32, 1
        %p349 = scmp.lt.s32.totalorder %s346, 0
        %s350 = scalar_select %p349, %s346, 0
        %s351 = sadd.s32 %s350, %s348
        %s352 = smul.addr %s351, 8
        %s353 = scalar_lea.vmem %s0, %s352
        %s354 = sadd.s32 %s33, %s34
        %s355 = sadd.s32 %s33, %s34
        %v356 = vld [vmem:[%s353] sm:$0xff]
        %v357 = vlaneseq
        %v358 = vand.u32 %v357, 127
        %v359 = vand.u32 %v358, 1
        %v360 = vld [vmem:[%s1] sm:$0x3]
        %vm361 = vcmask 64512
        %v363 = vsel %vm361, %v360, 0
        %365 = vmatprep.subr.mxu0 0.0
        %366 = vmatpush1.msra.mxu0 %v356
        %367 = vmatprep.subr.mxu0 0.0
        %368 = vmatpush1.msra.mxu0 0.0
        %369 = vmatprep.subr.mxu0 0.0
        %370 = vmatpush1.msra.mxu0 0.0
        %371 = vmatprep.subr.mxu0 0.0
        %372 = vmatpush1.msra.mxu0 0.0
        %373 = vmatprep.subr.mxu0 0.0
        %374 = vmatpush1.msra.mxu0 0.0
        %375 = vmatprep.subr.mxu0 0.0
        %376 = vmatpush1.msra.mxu0 0.0
        %377 = vmatprep.subr.mxu0 0.0
        %378 = vmatpush1.msra.mxu0 0.0
        %379 = vmatprep.subr.mxu0 0.0
        %380 = vmatpush1.msra.mxu0 0.0
        %381 = vmatprep.subr.mxu0 0.0
        %382 = vmatpush1.msra.mxu0 0.0
        %383 = vmatprep.subr.mxu0 0.0
        %384 = vmatpush1.msra.mxu0 0.0
        %385 = vmatprep.subr.mxu0 0.0
        %386 = vmatpush1.msra.mxu0 0.0
        %387 = vmatprep.subr.mxu0 0.0
        %388 = vmatpush1.msra.mxu0 0.0
        %389 = vmatprep.subr.mxu0 0.0
        %390 = vmatpush1.msra.mxu0 0.0
        %391 = vmatprep.subr.mxu0 0.0
        %392 = vmatpush1.msra.mxu0 0.0
        %393 = vmatprep.subr.mxu0 0.0
        %394 = vmatpush1.msra.mxu0 0.0
        %395 = vmatprep.subr.mxu0 0.0
        %396 = vmatpush1.msra.mxu0 0.0
        %397 = vmatprep.subr.mxu0 0.0
        %398 = vmatpush1.msra.mxu0 0.0
        %399 = vmatprep.subr.mxu0 0.0
        %400 = vmatpush1.msra.mxu0 0.0
        %401 = vmatprep.subr.mxu0 0.0
        %402 = vmatpush1.msra.mxu0 0.0
        %403 = vmatprep.subr.mxu0 0.0
        %404 = vmatpush1.msra.mxu0 0.0
        %405 = vmatprep.subr.mxu0 0.0
        %406 = vmatpush1.msra.mxu0 0.0
        %407 = vmatprep.subr.mxu0 0.0
        %408 = vmatpush1.msra.mxu0 0.0
        %409 = vmatprep.subr.mxu0 0.0
        %410 = vmatpush1.msra.mxu0 0.0
        %411 = vmatprep.subr.mxu0 0.0
        %412 = vmatpush1.msra.mxu0 0.0
        %413 = vmatprep.subr.mxu0 0.0
        %414 = vmatpush1.msra.mxu0 0.0
        %415 = vmatprep.subr.mxu0 0.0
        %416 = vmatpush1.msra.mxu0 0.0
        %417 = vmatprep.subr.mxu0 0.0
        %418 = vmatpush1.msra.mxu0 0.0
        %419 = vmatprep.subr.mxu0 0.0
        %420 = vmatpush1.msra.mxu0 0.0
        %421 = vmatprep.subr.mxu0 0.0
        %422 = vmatpush1.msra.mxu0 0.0
        %423 = vmatprep.subr.mxu0 0.0
        %424 = vmatpush1.msra.mxu0 0.0
        %425 = vmatprep.subr.mxu0 0.0
        %426 = vmatpush1.msra.mxu0 0.0
        %427 = vmatprep.subr.mxu0 0.0
        %428 = vmatpush1.msra.mxu0 0.0
        %429 = vmatprep.mubr.f32.mxu0 0.0
        %430 = vmatmul.mubr.f32.gmra.mrb[0].mxu0 %v363
        %v431 = vpop.f32.mrb[0].mxu0
        %v432 = vadd.f32 0.0, %v431
        %v433 = vpop.f32.mrb[0].mxu0
        %434 = vdwg.mxu0
        %v435 = vld [vmem:[%s2] sm:$0x3]
        %v437 = vsel %vm361, %v435, 0
        %439 = vmatprep.subr.mxu0 0.0
        %440 = vmatpush1.msra.mxu0 %v356
        %441 = vmatprep.subr.mxu0 0.0
        %442 = vmatpush1.msra.mxu0 0.0
        %443 = vmatprep.subr.mxu0 0.0
        %444 = vmatpush1.msra.mxu0 0.0
        %445 = vmatprep.subr.mxu0 0.0
        %446 = vmatpush1.msra.mxu0 0.0
        %447 = vmatprep.subr.mxu0 0.0
        %448 = vmatpush1.msra.mxu0 0.0
        %449 = vmatprep.subr.mxu0 0.0
        %450 = vmatpush1.msra.mxu0 0.0
        %451 = vmatprep.subr.mxu0 0.0
        %452 = vmatpush1.msra.mxu0 0.0
        %453 = vmatprep.subr.mxu0 0.0
        %454 = vmatpush1.msra.mxu0 0.0
        %455 = vmatprep.subr.mxu0 0.0
        %456 = vmatpush1.msra.mxu0 0.0
        %457 = vmatprep.subr.mxu0 0.0
        %458 = vmatpush1.msra.mxu0 0.0
        %459 = vmatprep.subr.mxu0 0.0
        %460 = vmatpush1.msra.mxu0 0.0
        %461 = vmatprep.subr.mxu0 0.0
        %462 = vmatpush1.msra.mxu0 0.0
        %463 = vmatprep.subr.mxu0 0.0
        %464 = vmatpush1.msra.mxu0 0.0
        %465 = vmatprep.subr.mxu0 0.0
        %466 = vmatpush1.msra.mxu0 0.0
        %467 = vmatprep.subr.mxu0 0.0
        %468 = vmatpush1.msra.mxu0 0.0
        %469 = vmatprep.subr.mxu0 0.0
        %470 = vmatpush1.msra.mxu0 0.0
        %471 = vmatprep.subr.mxu0 0.0
        %472 = vmatpush1.msra.mxu0 0.0
        %473 = vmatprep.subr.mxu0 0.0
        %474 = vmatpush1.msra.mxu0 0.0
        %475 = vmatprep.subr.mxu0 0.0
        %476 = vmatpush1.msra.mxu0 0.0
        %477 = vmatprep.subr.mxu0 0.0
        %478 = vmatpush1.msra.mxu0 0.0
        %479 = vmatprep.subr.mxu0 0.0
        %480 = vmatpush1.msra.mxu0 0.0
        %481 = vmatprep.subr.mxu0 0.0
        %482 = vmatpush1.msra.mxu0 0.0
        %483 = vmatprep.subr.mxu0 0.0
        %484 = vmatpush1.msra.mxu0 0.0
        %485 = vmatprep.subr.mxu0 0.0
        %486 = vmatpush1.msra.mxu0 0.0
        %487 = vmatprep.subr.mxu0 0.0
        %488 = vmatpush1.msra.mxu0 0.0
        %489 = vmatprep.subr.mxu0 0.0
        %490 = vmatpush1.msra.mxu0 0.0
        %491 = vmatprep.subr.mxu0 0.0
        %492 = vmatpush1.msra.mxu0 0.0
        %493 = vmatprep.subr.mxu0 0.0
        %494 = vmatpush1.msra.mxu0 0.0
        %495 = vmatprep.subr.mxu0 0.0
        %496 = vmatpush1.msra.mxu0 0.0
        %497 = vmatprep.subr.mxu0 0.0
        %498 = vmatpush1.msra.mxu0 0.0
        %499 = vmatprep.subr.mxu0 0.0
        %500 = vmatpush1.msra.mxu0 0.0
        %501 = vmatprep.subr.mxu0 0.0
        %502 = vmatpush1.msra.mxu0 0.0
        %503 = vmatprep.mubr.f32.mxu0 0.0
        %504 = vmatmul.mubr.f32.gmra.mrb[0].mxu0 %v437
        %v505 = vpop.f32.mrb[0].mxu0
        %v506 = vadd.f32 0.0, %v505
        %v507 = vpop.f32.mrb[0].mxu0
        %508 = vdwg.mxu0
        %vm509 = vcmp.eq.s32.totalorder %v359, 1
        %v510 = vsel %vm509, 1, 0
        %vm511 = vcmp.eq.s32.totalorder %v510, 1
        %v512 = vsel %vm511, %v432, %v506
        %s513 = sld [smem:[#allocation2]]
        %v514 = vstv %s513
        %v515 = vadd.f32 %v512, %v514
        %v516 = vxor.u32 %v515, 2147483648
        %v517 = vmul.f32 %v516, 1.442695
        %v518 = vpow.pop %v517
        %v519 = vadd.f32 %v518, 1.0
        %v520 = vrcp.pop %v519
        %v521 = vmul.f32 1.0, %v520
        %v522 = vadd.f32 %v521, 1e-06
        %v523 = vld [vmem:[%s3] sm:$0xff]
        %vm524 = vcmask 15360
        %v526 = vsel %vm524, %v523, 0
        %vm528 = vcmask 1041408
        %v530 = vsel %vm528, %v522, 0
        %532 = vmatprep.subr.mxu0 0.0
        %533 = vmatpush1.msra.mxu0 %v530
        %534 = vmatprep.subr.mxu0 0.0
        %535 = vmatpush1.msra.mxu0 0.0
        %536 = vmatprep.subr.mxu0 0.0
        %537 = vmatpush1.msra.mxu0 0.0
        %538 = vmatprep.subr.mxu0 0.0
        %539 = vmatpush1.msra.mxu0 0.0
        %540 = vmatprep.subr.mxu0 0.0
        %541 = vmatpush1.msra.mxu0 0.0
        %542 = vmatprep.subr.mxu0 0.0
        %543 = vmatpush1.msra.mxu0 0.0
        %544 = vmatprep.subr.mxu0 0.0
        %545 = vmatpush1.msra.mxu0 0.0
        %546 = vmatprep.subr.mxu0 0.0
        %547 = vmatpush1.msra.mxu0 0.0
        %548 = vmatprep.subr.mxu0 0.0
        %549 = vmatpush1.msra.mxu0 0.0
        %550 = vmatprep.subr.mxu0 0.0
        %551 = vmatpush1.msra.mxu0 0.0
        %552 = vmatprep.subr.mxu0 0.0
        %553 = vmatpush1.msra.mxu0 0.0
        %554 = vmatprep.subr.mxu0 0.0
        %555 = vmatpush1.msra.mxu0 0.0
        %556 = vmatprep.subr.mxu0 0.0
        %557 = vmatpush1.msra.mxu0 0.0
        %558 = vmatprep.subr.mxu0 0.0
        %559 = vmatpush1.msra.mxu0 0.0
        %560 = vmatprep.subr.mxu0 0.0
        %561 = vmatpush1.msra.mxu0 0.0
        %562 = vmatprep.subr.mxu0 0.0
        %563 = vmatpush1.msra.mxu0 0.0
        %564 = vmatprep.subr.mxu0 0.0
        %565 = vmatpush1.msra.mxu0 0.0
        %566 = vmatprep.subr.mxu0 0.0
        %567 = vmatpush1.msra.mxu0 0.0
        %568 = vmatprep.subr.mxu0 0.0
        %569 = vmatpush1.msra.mxu0 0.0
        %570 = vmatprep.subr.mxu0 0.0
        %571 = vmatpush1.msra.mxu0 0.0
        %572 = vmatprep.subr.mxu0 0.0
        %573 = vmatpush1.msra.mxu0 0.0
        %574 = vmatprep.subr.mxu0 0.0
        %575 = vmatpush1.msra.mxu0 0.0
        %576 = vmatprep.subr.mxu0 0.0
        %577 = vmatpush1.msra.mxu0 0.0
        %578 = vmatprep.subr.mxu0 0.0
        %579 = vmatpush1.msra.mxu0 0.0
        %580 = vmatprep.subr.mxu0 0.0
        %581 = vmatpush1.msra.mxu0 0.0
        %582 = vmatprep.subr.mxu0 0.0
        %583 = vmatpush1.msra.mxu0 0.0
        %584 = vmatprep.subr.mxu0 0.0
        %585 = vmatpush1.msra.mxu0 0.0
        %586 = vmatprep.subr.mxu0 0.0
        %587 = vmatpush1.msra.mxu0 0.0
        %588 = vmatprep.subr.mxu0 0.0
        %589 = vmatpush1.msra.mxu0 0.0
        %590 = vmatprep.subr.mxu0 0.0
        %591 = vmatpush1.msra.mxu0 0.0
        %592 = vmatprep.subr.mxu0 0.0
        %593 = vmatpush1.msra.mxu0 0.0
        %594 = vmatprep.subr.mxu0 0.0
        %595 = vmatpush1.msra.mxu0 0.0
        %596 = vmatprep.mubr.f32.mxu0 0.0
        %597 = vmatmul.mubr.f32.gmra.mrb[0].mxu0 %v526
        %v598 = vpop.f32.mrb[0].mxu0
        %v599 = vadd.f32 0.0, %v598
        %v600 = vpop.f32.mrb[0].mxu0
        %601 = vdwg.mxu0
        %v602 = vld [vmem:[%s5] sm:$0xff]
        %603 = vset.pattern.permute.xlu0 0
        %604 = vperm.xlu0 %603, %v602
        %v605 = vpop.permute.xlu0 %604
        %vm606 = vcmp.eq.s32.totalorder %v605, %v359
        %v607 = vld [vmem:[%s4] sm:$0xff]
        %609 = vset.pattern.permute.xlu0 0
        %610 = vperm.xlu0 %609, %v607
        %v611 = vpop.permute.xlu0 %610
        %v613 = vsel %vm606, %v611, %v599
        %v614 = vmul.f32 %v356, %v613
        %615 = vst [vmem:[%s339] sm:$0xff] %v614
        %p616 = scmp.eq.s32.totalorder %s34, 0
        // Predicated region
        $region49: #{tpu_custom_call.1} parent=47 // pred_check
          %p617 = pneg %p616
        $region50: #{tpu_custom_call.1} parent=47 // pred_check_branch
          %619 = sbr.rel (%p617) target = $region52
        $region51: #{tpu_custom_call.1} parent=47 // pred_region
          %620 = vst [vmem:[%s345] sm:$0x1] 0.0
        $region52: #{tpu_custom_call.1} parent=47 // pred_fallthru
          _
        %v621 = vlog2.pop %v522
        %v622 = vmul.f32 %v621, 0.6931472
        %v623 = vsel %vm528, %v622, 0.0
        %624 = vadd.xlane.f32.xlu0 %v623
        %v625 = vpop.xlane.xlu0 %624
        %v626 = vrot.slane %v625, 4
        %v627 = vadd.f32 %v625, %v626
        %v628 = vrot.slane %v627, 2
        %v629 = vadd.f32 %v627, %v628
        %v630 = vrot.slane %v629, 1
        %v631 = vadd.f32 %v629, %v630
        %s632 = vtos %v631
        %v633 = vld [vmem:[%s345] sm:$0x1]
        %s634 = smul.f32 %s632, 2.0
        %v635 = vstv %s634
        %v636 = vadd.f32 %v633, %v635
        %637 = vst [vmem:[%s345] sm:$0x1] %v636
        %s638 = sand.u32 %s214, 1
        %s639 = scalar_lea.sflag [#allocation4], %s638
        %s640 = sand.u32 %s214, 1
        %s641 = smul.addr %s640, 8
        %s642 = scalar_lea.vmem [#allocation3], %s641
        %s643 = sand.u32 %s242, 1
        %s644 = scalar_lea.sflag [#allocation6], %s643
        %s645 = sand.u32 %s242, 1
        %s646 = scalar_lea.vmem [#allocation5], %s645
        // Predicated region
        $region53: #{tpu_custom_call.1} parent=47 // pred_check
          %p647 = pneg %p224
        $region54: #{tpu_custom_call.1} parent=47 // pred_check_branch
          %649 = sbr.rel (%p647) target = $region56
        $region55: #{tpu_custom_call.1} parent=47 // pred_region
          %s650 = sadd.s32 %s33, %s34
          %s652 = ssub.s32 128, 128
          %653 = vsyncadd %s639, %s652
          %s654 = sadd.s32 %s650, %s32
          %s655 = smul.addr %s654, 128
          %s656 = scalar_lea.hbm %s7, %s655
          %s658 = sshll.u32 %s642, 4
          %s659 = int_to_ptr.vmem [resolvable:$true] %s658
          %661 = dma.vmem_to_hbm [thread:$0]  %s659, 128, %s656, %s639
        $region56: #{tpu_custom_call.1} parent=47 // pred_fallthru
          _
        // Predicated region
        $region57: #{tpu_custom_call.1} parent=47 // pred_check
          %p662 = pneg %p252
        $region58: #{tpu_custom_call.1} parent=47 // pred_check_branch
          %664 = sbr.rel (%p662) target = $region60
        $region59: #{tpu_custom_call.1} parent=47 // pred_region
          %s666 = ssub.s32 16, 16
          %667 = vsyncadd %s644, %s666
          %s668 = sadd.s32 %s33, %s32
          %s669 = smul.addr %s668, 16
          %s670 = scalar_lea.hbm %s8, %s669
          %s672 = sshll.u32 %s646, 4
          %s673 = int_to_ptr.vmem [resolvable:$true] %s672
          %675 = dma.vmem_to_hbm [thread:$0]  %s673, 16, %s670, %s644
        $region60: #{tpu_custom_call.1} parent=47 // pred_fallthru
          _
      $region48: #{tpu_custom_call.1} parent=5 // pred_fallthru
        _
      %p676 = scmp.le.s32.totalorder 2, %s22
      // Predicated region
      $region61: #{tpu_custom_call.1} parent=5 // pred_check
        %p677 = pneg %p676
      $region62: #{tpu_custom_call.1} parent=5 // pred_check_branch
        %679 = sbr.rel (%p677) target = $region64
      $region63: #{tpu_custom_call.1} parent=5 // pred_region
        %s680 = ssub.s32 %s22, 2
        // Predicated region
        $region65: #{tpu_custom_call.1} parent=63 // pred_check
          %p681 = pneg %p230
        $region66: #{tpu_custom_call.1} parent=63 // pred_check_branch
          %683 = sbr.rel (%p681) target = $region68
        $region67: #{tpu_custom_call.1} parent=63 // pred_region
          %s684 = sand.u32 %s215, 1
          %s685 = scalar_lea.sflag [#allocation4], %s684
          %s686 = sand.u32 %s215, 1
          %s687 = smul.addr %s686, 8
          %s688 = scalar_lea.vmem [#allocation3], %s687
          %689 = dma.done %s685, 128
        $region68: #{tpu_custom_call.1} parent=63 // pred_fallthru
          _
        // Predicated region
        $region69: #{tpu_custom_call.1} parent=63 // pred_check
          %p690 = pneg %p258
        $region70: #{tpu_custom_call.1} parent=63 // pred_check_branch
          %692 = sbr.rel (%p690) target = $region72
        $region71: #{tpu_custom_call.1} parent=63 // pred_region
          %s693 = sand.u32 %s243, 1
          %s694 = scalar_lea.sflag [#allocation6], %s693
          %s695 = sand.u32 %s243, 1
          %s696 = scalar_lea.vmem [#allocation5], %s695
          %697 = dma.done %s694, 16
        $region72: #{tpu_custom_call.1} parent=63 // pred_fallthru
          _
      $region64: #{tpu_custom_call.1} parent=5 // pred_fallthru
        _
    $region6: #{tpu_custom_call.1} parent=1 // loop_footer
      %s26 = sadd.s32 1, %s22
    $region7: #{tpu_custom_call.1} parent=1 // loop_footer_branch
      %21 = sbr.rel target = $region3
    $region8: #{tpu_custom_call.1} parent=1 // loop_exit
      _
    %698 = vsyncpa [#allocation4], 1
    %s699 = scalar_lea.sflag [#allocation4], 1
    %700 = vsyncpa %s699, 1
    %701 = vsyncpa [#allocation6], 1
    %s702 = scalar_lea.sflag [#allocation6], 1
    %703 = vsyncpa %s702, 1

</llo_original>
